<compile_context>
chip_gen: v7x
topology: tpu7x:2x2x1
jax: 0.10.0
libtpu: 0.0.40
codegen_flags: <defaults>
</compile_context>

<pallas_src>
import functools

import jax
import jax.numpy as jnp
from jax.experimental import pallas as pl
from jax.experimental.pallas import tpu as pltpu


def _ceil_div(a, b):
    return -(-a // b)


def _round_up(a, m):
    return _ceil_div(a, m) * m


def _l_color_kernel(x_ref, o_ref, *, rem):
    """Accumulate per-row (per image-channel) sums into the resident output.

    x_ref: (tile_r, tile_hw) block of the (B*3, H*W) input.
    o_ref: (tile_r, 1) f32 output block, resident across the spatial grid axis.
    rem:   valid lane count of the last spatial block (0 => no masking needed).
    """
    si = pl.program_id(1)

    @pl.when(si == 0)
    def _():
        o_ref[...] = jnp.zeros_like(o_ref)

    def _accum(xv):
        # Lane-axis reduce: ~1 VPU add per input vreg + one cheap XLU reduce
        # per 8 rows; result is a tiny (tile_r, 1) add into the resident output.
        o_ref[...] += jnp.sum(xv, axis=-1, keepdims=True)

    if rem == 0:
        _accum(x_ref[...].astype(jnp.float32))
    else:
        last = pl.num_programs(1) - 1

        @pl.when(si != last)
        def _():
            _accum(x_ref[...].astype(jnp.float32))

        @pl.when(si == last)
        def _():
            # Ragged spatial tail: lanes >= rem hold unspecified values.
            xv = x_ref[...].astype(jnp.float32)
            col = jax.lax.broadcasted_iota(jnp.int32, xv.shape, 1)
            _accum(jnp.where(col < rem, xv, jnp.float32(0.0)))


def l_color_loss(x, loss_weight=1.0, *, target_block_bytes=8 * 1024 * 1024):
    """Pallas implementation of L_color.forward.  x: (B, 3, H, W)."""
    b, c, h, w = x.shape
    assert c == 3, "L_color assumes 3 input channels (RGB)"
    hw = h * w
    rows = b * 3                      # one row per (image, channel)
    itemsize = jnp.dtype(x.dtype).itemsize

    LANE, SUB = 128, 8

    if SUB * hw * itemsize <= target_block_bytes:
        # Case A: the full spatial extent of >=8 rows fits in one block.
        tile_hw = hw                  # lane dim == full array dim (always legal)
        ns = 1
        rem = 0
        rows_fit = max(SUB, (target_block_bytes // (hw * itemsize)) // SUB * SUB)
        if rows <= SUB:
            tile_r = rows             # full row extent (legal for any size)
        else:
            # Split rows into >=2 blocks (multiple of 8) so v7x's two
            # TensorCores both get work; still bounded by the block budget.
            half = _round_up(_ceil_div(rows, 2), SUB)
            tile_r = min(rows_fit, half)
    else:
        # Case B: large images — tile the spatial axis, mask the ragged tail.
        tile_r = rows if rows < SUB else SUB
        tile_hw = max(LANE, (target_block_bytes // (tile_r * itemsize)) // LANE * LANE)
        ns = _ceil_div(hw, tile_hw)
        rem = hw % tile_hw

    nb = _ceil_div(rows, tile_r)

    # Free view for contiguous NCHW input; no padded copy is ever materialized.
    x2 = x.reshape(rows, hw)

    kernel = functools.partial(_l_color_kernel, rem=rem)

    sums = pl.pallas_call(
        kernel,
        out_shape=jax.ShapeDtypeStruct((rows, 1), jnp.float32),
        grid_spec=pltpu.PrefetchScalarGridSpec(
            num_scalar_prefetch=0,
            grid=(nb, ns),
            in_specs=[pl.BlockSpec((tile_r, tile_hw), lambda ri, si: (ri, si))],
            out_specs=pl.BlockSpec((tile_r, 1), lambda ri, si: (ri, 0)),
        ),
        compiler_params=pltpu.CompilerParams(
            dimension_semantics=("parallel", "arbitrary"),
            vmem_limit_bytes=32 * 1024 * 1024,
        ),
    )(x2)

    # Tiny O(B) finalize in plain JAX: per-image channel means -> k -> mean.
    means = sums[:, 0].reshape(b, 3) * jnp.float32(1.0 / hw)
    mr = means[:, 0]
    mg = means[:, 1]
    mb = means[:, 2]
    k = jnp.sqrt((mr - mg) ** 2 + (mr - mb) ** 2 + (mb - mg) ** 2)
    return jnp.float32(loss_weight) * jnp.mean(k)


def l_color_ref(x, loss_weight=1.0):
    """Plain-JAX reference mirroring the PyTorch forward."""
    mean_rgb = jnp.mean(x.astype(jnp.float32), axis=(2, 3), keepdims=True)
    mr = mean_rgb[:, 0:1]
    mg = mean_rgb[:, 1:2]
    mb = mean_rgb[:, 2:3]
    drg = (mr - mg) ** 2
    drb = (mr - mb) ** 2
    dgb = (mb - mg) ** 2
    k = jnp.mean(jnp.sqrt(drg + drb + dgb))
    return loss_weight * k


if __name__ == "__main__":
    key = jax.random.PRNGKey(0)
    k1, k2, k3 = jax.random.split(key, 3)

    # 1) Small canonical shape: single (rows=6, hw=256) block, one grid step.
    x1 = jax.random.uniform(k1, (2, 3, 16, 16), dtype=jnp.float32)
    out1 = jax.block_until_ready(l_color_loss(x1, loss_weight=1.0))
    ref1 = l_color_ref(x1, loss_weight=1.0)
    assert jnp.allclose(out1, ref1, rtol=1e-5, atol=1e-6), (out1, ref1)

    # 2) Odd shapes: rows=9 -> two row blocks (8 + ragged 1), hw=99 (non-128).
    x2 = jax.random.uniform(k2, (3, 3, 9, 11), dtype=jnp.float32)
    out2 = jax.block_until_ready(l_color_loss(x2, loss_weight=0.5))
    ref2 = l_color_ref(x2, loss_weight=0.5)
    assert jnp.allclose(out2, ref2, rtol=1e-5, atol=1e-6), (out2, ref2)

    # 3) Force the spatially-tiled path with a masked ragged tail by shrinking
    #    the block budget (hw=576 -> 5 blocks of 128 lanes, last has 64 valid).
    x3 = jax.random.uniform(k3, (2, 3, 24, 24), dtype=jnp.float32)
    out3 = jax.block_until_ready(
        l_color_loss(x3, loss_weight=2.0, target_block_bytes=4096)
    )
    ref3 = l_color_ref(x3, loss_weight=2.0)
    assert jnp.allclose(out3, ref3, rtol=1e-5, atol=1e-6), (out3, ref3)

    print("KERNEL_OK")
</pallas_src>

<mosaic_0001>
module attributes {stable_mosaic.version = 11 : i64} {
  func.func @_l_color_kernel(%arg0: i32, %arg1: i32, %arg2: memref<6x256xf32, #tpu.memory_space<vmem>>, %arg3: memref<6x1xf32, #tpu.memory_space<vmem>>) attributes {dimension_semantics = [#tpu.dimension_semantics<parallel>, #tpu.dimension_semantics<arbitrary>], iteration_bounds = array<i64: 1, 1>, scalar_prefetch = 0 : i64, scratch_operands = 0 : i64, tpu.core_type = #tpu.core_type<tc>, window_params = [{transform_indices = @transform_0, window_bounds = array<i64: 6, 256>}, {transform_indices = @transform_1, window_bounds = array<i64: 6, 1>}]} {
    %c0_i32 = arith.constant 0 : i32
    %0 = arith.cmpi eq, %arg1, %c0_i32 : i32
    %1 = arith.extui %0 : i1 to i32
    %c0_i32_0 = arith.constant 0 : i32
    %2 = arith.cmpi ne, %1, %c0_i32_0 : i32
    scf.if %2 {
      %cst_6 = arith.constant 0.000000e+00 : f32
      %9 = vector.broadcast %cst_6 : f32 to vector<6x1xf32>
      %c0_7 = arith.constant 0 : index
      %c0_8 = arith.constant 0 : index
      %10 = vector.load %arg3[%c0_7, %c0_8] : memref<6x1xf32, #tpu.memory_space<vmem>>, vector<6x1xf32>
      tpu.vector_store %arg3[%c0_7, %c0_8], %9 {strides = array<i32>} : memref<6x1xf32, #tpu.memory_space<vmem>>, vector<6x1xf32>,
    } else {
    }
    %c0 = arith.constant 0 : index
    %c0_1 = arith.constant 0 : index
    %3 = vector.load %arg2[%c0, %c0_1] : memref<6x256xf32, #tpu.memory_space<vmem>>, vector<6x256xf32>
    %c0_2 = arith.constant 0 : index
    %c0_3 = arith.constant 0 : index
    %4 = vector.load %arg3[%c0_2, %c0_3] : memref<6x1xf32, #tpu.memory_space<vmem>>, vector<6x1xf32>
    %cst = arith.constant dense<0.000000e+00> : vector<6xf32>
    %5 = vector.multi_reduction <add>, %3, %cst [1] : vector<6x256xf32> to vector<6xf32>
    %6 = vector.shape_cast %5 : vector<6xf32> to vector<6x1xf32>
    %7 = arith.addf %4, %6 : vector<6x1xf32>
    %c0_4 = arith.constant 0 : index
    %c0_5 = arith.constant 0 : index
    %8 = vector.load %arg3[%c0_4, %c0_5] : memref<6x1xf32, #tpu.memory_space<vmem>>, vector<6x1xf32>
    tpu.vector_store %arg3[%c0_4, %c0_5], %7 {strides = array<i32>} : memref<6x1xf32, #tpu.memory_space<vmem>>, vector<6x1xf32>,
    return
  }
  func.func @transform_0(%arg0: i32, %arg1: i32) -> (i32, i32) {
    %c0_i32 = arith.constant 0 : i32
    return %arg0, %arg1 : i32, i32
  }
  func.func @transform_1(%arg0: i32, %arg1: i32) -> (i32, i32) {
    %c0_i32 = arith.constant 0 : i32
    %c0_i32_0 = arith.constant 0 : i32
    return %arg0, %c0_i32 : i32, i32
  }
}

</mosaic_0001>

<llo_original>
// kernel: tpu_custom_call.1
$region0: #{tpu_custom_call.1}
  #allocation0 [shape = 'u32[]', space=smem, size = 0x4, offset = 0x4, fixed_abs, tag = 'smem constant byte address 0x4 - core index']
  #allocation1 [shape = 'u32[144,128]{1,0:T(1,128)}', space=vmem, size = 0x12000, scoped, tag = 'internal scratch']
  %s0 = inlined_call_operand.hbm [shape: f32[6,256], index: 0, kind: input, shape index: {}]
  %s1 = inlined_call_operand.vmem [shape: f32[6,1], index: 1, kind: output, shape index: {}]
  %s2 = sld [smem:[#allocation0]]
  $region22: #{tpu_custom_call.1} parent=0
    _
  %s4 = ssub.s32 1, %s2
  %s5 = scalar_select 0, %s4, %s2
  $region1: #{tpu_custom_call.1} parent=0
    #allocation2 [shape = 'u8[8192]{0}', space=vmem, size = 0x2000, scoped, tag = 'input window, operand 0, single buffered']
    #allocation3 [shape = 's32[1]{0}', space=sflag, size = 0x4, scoped, tag = 'scoped memory for tpu_custom_call.1']
    %6 = vsyncpa [#allocation3], 0
    // Predicated region
    $region2: #{tpu_custom_call.1} parent=1 // pred_check
      _
    $region3: #{tpu_custom_call.1} parent=1 // pred_check_branch
      %8 = sbr.rel (0) target = $region5
    $region4: #{tpu_custom_call.1} parent=1 // pred_region
      %s10 = ssub.s32 256, 256
      %11 = vsyncadd [#allocation3], %s10
      %s13 = sshll.u32 [#allocation2], 4
      %s14 = int_to_ptr.vmem [resolvable:$true] %s13
      %16 = dma.hbm_to_vmem [thread:$0]  %s0, 256, %s14, [#allocation3]
    $region5: #{tpu_custom_call.1} parent=1 // pred_fallthru
      _
    // Predicated region
    $region6: #{tpu_custom_call.1} parent=1 // pred_check
      _
    $region7: #{tpu_custom_call.1} parent=1 // pred_check_branch
      %18 = sbr.rel (0) target = $region9
    $region8: #{tpu_custom_call.1} parent=1 // pred_region
      %19 = dma.done [#allocation3], 256
    $region9: #{tpu_custom_call.1} parent=1 // pred_fallthru
      _
    %p20 = scmp.eq.s32.totalorder 0, 0
    // Predicated region
    $region10: #{tpu_custom_call.1} parent=1 // pred_check
      %p21 = pneg %p20
    $region11: #{tpu_custom_call.1} parent=1 // pred_check_branch
      %23 = sbr.rel (%p21) target = $region13
    $region12: #{tpu_custom_call.1} parent=1 // pred_region
      %vm24 = vcmask 5120
      %25 = vst.msk [vmem:[%s1] sm:$0x3f] %vm24, 0.0
    $region13: #{tpu_custom_call.1} parent=1 // pred_fallthru
      _
    %v26 = vld [vmem:[#allocation2] sm:$0x3f]
    %v27 = vld [vmem:[#allocation2 + $0x8] sm:$0x3f]
    %v28 = vld [vmem:[%s1] sm:$0x3f]
    %vm29 = vcmask 1045504
    %v30 = vsel %vm29, %v26, 0.0
    %v31 = vsel %vm29, %v27, 0.0
    %v32 = vadd.f32 %v30, %v31
    %33 = vadd.xlane.f32.xlu0 %v32
    %v34 = vpop.xlane.xlu0 %33
    %v35 = vadd.f32 %v28, %v34
    %vm36 = vcmask 5120
    %37 = vst.msk [vmem:[%s1] sm:$0x3f] %vm36, %v35
    // Predicated region
    $region14: #{tpu_custom_call.1} parent=1 // pred_check
      _
    $region15: #{tpu_custom_call.1} parent=1 // pred_check_branch
      %39 = sbr.rel (0) target = $region17
    $region16: #{tpu_custom_call.1} parent=1 // pred_region
      _
    $region17: #{tpu_custom_call.1} parent=1 // pred_fallthru
      _
    // Predicated region
    $region18: #{tpu_custom_call.1} parent=1 // pred_check
      _
    $region19: #{tpu_custom_call.1} parent=1 // pred_check_branch
      %41 = sbr.rel (0) target = $region21
    $region20: #{tpu_custom_call.1} parent=1 // pred_region
      _
    $region21: #{tpu_custom_call.1} parent=1 // pred_fallthru
      _
    %42 = vsyncpa [#allocation3], 1

</llo_original>
